<compile_context>
chip_gen: v5e
topology: v5e:2x2
jax: 0.10.0
libtpu: 0.0.40
codegen_flags: <defaults>
</compile_context>

<pallas_src>
import math
import jax
import jax.numpy as jnp
from jax.experimental import pallas as pl
from jax.experimental.pallas import tpu as pltpu


_VMEM_BUDGET = 20 * 1024 * 1024           # tile-selection budget (safe on v5e/v6e/v7x)
_VMEM_LIMIT = 32 * 1024 * 1024            # scoped-VMEM request (<= 64 MiB v7x physical)
_RESIDENT_WEIGHT_LIMIT = 4 * 1024 * 1024  # above this, stream weights (H-tiled path)


# ----------------------------------------------------------------------------
# Exact (erf-based) GELU matching torch.nn.GELU() default (approximate='none').
# Abramowitz & Stegun 7.1.26 rational approximation, |error| < 1.5e-7.
# Kept in fp32 (v5e has no bf16 VPU/EUP); exp goes to the EUP slot.
# ----------------------------------------------------------------------------
def _erf(x):
    a1, a2, a3, a4, a5 = (0.254829592, -0.284496736, 1.421413741,
                          -1.453152027, 1.061405429)
    p = 0.3275911
    ax = jnp.abs(x)
    t = 1.0 / (1.0 + p * ax)
    poly = ((((a5 * t + a4) * t + a3) * t + a2) * t + a1) * t
    e = 1.0 - poly * jnp.exp(-ax * ax)
    return jnp.where(x >= 0, e, -e)


def _gelu_exact(x):
    return 0.5 * x * (1.0 + _erf(x * 0.7071067811865476))


# ----------------------------------------------------------------------------
# Kernel 1: weights fully VMEM-resident.  y = GELU(x @ W1^T + b1) @ W2^T + b2
# ----------------------------------------------------------------------------
def _ffn_kernel_resident(x_ref, w1_ref, b1_ref, w2_ref, b2_ref, o_ref):
    x = x_ref[...]
    h = jnp.dot(x, w1_ref[...], preferred_element_type=jnp.float32)   # MXU
    h = h + b1_ref[...]
    h = _gelu_exact(h)                                                # fp32 VPU/EUP
    h = h.astype(w2_ref.dtype)
    y = jnp.dot(h, w2_ref[...], preferred_element_type=jnp.float32)   # MXU
    y = y + b2_ref[...]
    o_ref[...] = y.astype(o_ref.dtype)
    # TODO(synk): training-mode dropout mask would be applied here.


# ----------------------------------------------------------------------------
# Kernel 2: hidden (4E) axis tiled; weights stream, second matmul accumulates
# into an fp32 VMEM scratch across the trailing "arbitrary" grid axis.
# ----------------------------------------------------------------------------
def _ffn_kernel_htiled(x_ref, w1_ref, b1_ref, w2_ref, b2_ref, o_ref, acc_ref):
    hid = pl.program_id(1)

    @pl.when(hid == 0)
    def _():
        acc_ref[...] = jnp.zeros_like(acc_ref)

    x = x_ref[...]
    h = jnp.dot(x, w1_ref[...], preferred_element_type=jnp.float32)   # MXU
    h = h + b1_ref[...]
    h = _gelu_exact(h)
    h = h.astype(w2_ref.dtype)
    acc_ref[...] += jnp.dot(h, w2_ref[...], preferred_element_type=jnp.float32)

    @pl.when(hid == pl.num_programs(1) - 1)
    def _():
        o_ref[...] = (acc_ref[...] + b2_ref[...]).astype(o_ref.dtype)
    # TODO(synk): training-mode dropout mask would be applied in the finalize.


# ----------------------------------------------------------------------------
# Helpers: BlockSpec construction and tile-size selection
# ----------------------------------------------------------------------------
def _spec(shape, index_map, single_buffer=False):
    """BlockSpec; optionally single-buffered (constant index_map -> 2nd buffer
    is never used).  Falls back gracefully if pipeline_mode is unavailable."""
    if single_buffer:
        try:
            return pl.BlockSpec(shape, index_map, pipeline_mode=pl.Buffered(1))
        except TypeError:
            pass
    return pl.BlockSpec(shape, index_map)


def _choose_row_tile(M, E, H, in_bytes, requested=None):
    if M <= 8:
        return M
    if requested is not None:
        tm = min(int(requested), M)
    else:
        # per-row VMEM: double-buffered x tile + double-buffered f32 out tile
        # + transient hidden activation (f32 + low-precision copy).
        per_row = 2 * E * in_bytes + 2 * E * 4 + H * (4 + in_bytes)
        tm = max(8, _VMEM_BUDGET // per_row)
        tm = min(tm, M, 4096)
    # keep >= 2 grid steps when M allows -> both v7x TensorCores get work
    if M >= 16:
        tm = min(tm, (M + 1) // 2)
    # MXU-friendly multiples (256 for the v6e/v7x 256x256 MXU, else 8)
    if tm >= 256:
        tm = (tm // 256) * 256
    else:
        tm = max(8, (tm // 8) * 8)
    return int(tm)


def _choose_h_tile(H, E, tm, in_bytes, requested=None):
    if requested is not None and H % int(requested) == 0:
        return int(requested)
    # fixed residency: double-buffered x + double-buffered out + fp32 acc scratch
    fixed = 2 * tm * E * in_bytes + 2 * tm * E * 4 + tm * E * 4
    # per hidden column: double-buffered W1/W2 tiles + transient activation
    per_col = 2 * (2 * E * in_bytes) + tm * (4 + in_bytes)
    budget_cols = max(128, (_VMEM_BUDGET - fixed) // max(per_col, 1))
    for cand in (4096, 2048, 1024, 512, 256, 128):
        if cand <= budget_cols and H % cand == 0:
            return cand
    return H  # degenerate fallback: whole hidden dim (still correct)


# ----------------------------------------------------------------------------
# Module wrapper
# ----------------------------------------------------------------------------
def feed_forward(x, w1, b1, w2, b2, *, compute_dtype=jnp.bfloat16,
                 block_rows=None, h_tile=None, force_h_tiled=False):
    """
    x : (..., E)
    w1: (4E, E), b1: (4E,)  -- PyTorch Linear layout (out_features, in_features)
    w2: (E, 4E), b2: (E,)
    compute_dtype: matmul-input dtype (default bf16; fp32 accumulation always).
    """
    orig_shape = x.shape
    E = orig_shape[-1]
    H = w1.shape[0]
    assert w1.shape == (H, E) and w2.shape == (E, H)
    assert b1.shape == (H,) and b2.shape == (E,)
    M = 1
    for d in orig_shape[:-1]:
        M *= int(d)

    out_dtype = x.dtype
    cdt = out_dtype if compute_dtype is None else compute_dtype
    in_bytes = jnp.dtype(cdt).itemsize

    x2d = x.reshape(M, E).astype(cdt)
    # Pre-transpose once outside the kernel -> plain (rows, in) @ (in, out) on MXU.
    w1t = w1.astype(cdt).T                     # (E, H)
    w2t = w2.astype(cdt).T                     # (H, E)
    b1r = b1.reshape(1, H).astype(jnp.float32)
    b2r = b2.reshape(1, E).astype(jnp.float32)

    tm = _choose_row_tile(M, E, H, in_bytes, block_rows)
    n_rows = pl.cdiv(M, tm)

    weight_bytes = 2 * E * H * in_bytes
    use_htiled = force_h_tiled or weight_bytes > _RESIDENT_WEIGHT_LIMIT

    cost = pl.CostEstimate(
        flops=4 * M * E * H,
        transcendentals=M * H,
        bytes_accessed=(M * E * in_bytes                      # x
                        + M * E * jnp.dtype(out_dtype).itemsize  # out
                        + 2 * E * H * in_bytes                # weights
                        + 4 * (H + E)),                       # biases
    )

    if not use_htiled:
        out2d = pl.pallas_call(
            _ffn_kernel_resident,
            out_shape=jax.ShapeDtypeStruct((M, E), out_dtype),
            grid=(n_rows,),
            in_specs=[
                pl.BlockSpec((tm, E), lambda i: (i, 0)),                  # x rows
                _spec((E, H), lambda i: (0, 0), single_buffer=True),      # W1^T
                _spec((1, H), lambda i: (0, 0), single_buffer=True),      # b1
                _spec((H, E), lambda i: (0, 0), single_buffer=True),      # W2^T
                _spec((1, E), lambda i: (0, 0), single_buffer=True),      # b2
            ],
            out_specs=pl.BlockSpec((tm, E), lambda i: (i, 0)),
            compiler_params=pltpu.CompilerParams(
                dimension_semantics=("parallel",),
                vmem_limit_bytes=_VMEM_LIMIT),
            cost_estimate=cost,
        )(x2d, w1t, b1r, w2t, b2r)
    else:
        th = _choose_h_tile(H, E, tm, in_bytes, h_tile)
        n_h = H // th
        out2d = pl.pallas_call(
            _ffn_kernel_htiled,
            out_shape=jax.ShapeDtypeStruct((M, E), out_dtype),
            grid=(n_rows, n_h),
            in_specs=[
                pl.BlockSpec((tm, E), lambda i, h: (i, 0)),               # x rows (resident over h)
                pl.BlockSpec((E, th), lambda i, h: (0, h)),               # W1^T column tile
                pl.BlockSpec((1, th), lambda i, h: (0, h)),               # b1 tile
                pl.BlockSpec((th, E), lambda i, h: (h, 0)),               # W2^T row tile
                _spec((1, E), lambda i, h: (0, 0), single_buffer=True),   # b2
            ],
            out_specs=pl.BlockSpec((tm, E), lambda i, h: (i, 0)),
            scratch_shapes=[pltpu.VMEM((tm, E), jnp.float32)],
            compiler_params=pltpu.CompilerParams(
                dimension_semantics=("parallel", "arbitrary"),
                vmem_limit_bytes=_VMEM_LIMIT),
            cost_estimate=cost,
        )(x2d, w1t, b1r, w2t, b2r)

    return out2d.reshape(orig_shape)


# ----------------------------------------------------------------------------
# Pure-JAX reference for correctness checks
# ----------------------------------------------------------------------------
def reference(x, w1, b1, w2, b2):
    h = jax.nn.gelu(x @ w1.T + b1, approximate=False)   # exact erf GELU
    return h @ w2.T + b2


if __name__ == "__main__":
    # cfg: emb_dim=32, drop_rate=0.0 (eval-mode dropout = identity)
    E = 32
    H = 4 * E

    key = jax.random.PRNGKey(0)
    k_x, k_w1, k_b1, k_w2, k_b2, k_x2, k_w = jax.random.split(key, 7)

    w1 = jax.random.normal(k_w1, (H, E), dtype=jnp.float32) * (1.0 / math.sqrt(E))
    b1 = jax.random.normal(k_b1, (H,), dtype=jnp.float32) * 0.1
    w2 = jax.random.normal(k_w2, (E, H), dtype=jnp.float32) * (1.0 / math.sqrt(H))
    b2 = jax.random.normal(k_b2, (E,), dtype=jnp.float32) * 0.1

    # --- small shape, fp32 MXU path, resident weights (2-step row grid) ---
    B, S = 2, 8
    x = jax.random.normal(k_x, (B, S, E), dtype=jnp.float32)
    ref = reference(x, w1, b1, w2, b2)
    out_fp32 = jax.block_until_ready(
        feed_forward(x, w1, b1, w2, b2, compute_dtype=jnp.float32))
    assert out_fp32.shape == (B, S, E)
    assert jnp.allclose(out_fp32, ref, atol=5e-4, rtol=5e-4), "fp32 mismatch (small)"

    # --- default bf16-input / fp32-accumulate path (expected precision change) ---
    out_bf16 = jax.block_until_ready(feed_forward(x, w1, b1, w2, b2))
    assert jnp.all(jnp.isfinite(out_bf16))
    assert float(jnp.max(jnp.abs(out_bf16 - ref))) < 0.25, "bf16 path mismatch"

    # --- non-divisible row count: exercises pl.cdiv + masked trailing block ---
    B2, S2 = 4, 77                                    # M = 308, tm = 152 -> grid 3
    x2 = jax.random.normal(k_x2, (B2, S2, E), dtype=jnp.float32)
    out2 = jax.block_until_ready(
        feed_forward(x2, w1, b1, w2, b2, compute_dtype=jnp.float32))
    ref2 = reference(x2, w1, b1, w2, b2)
    assert jnp.allclose(out2, ref2, atol=5e-4, rtol=5e-4), "fp32 mismatch (tiled/remainder)"

    # --- forced H-tiled (streamed-weights) accumulate path at E=128 ---
    E3, H3 = 128, 512
    k_w1b, k_b1b, k_w2b, k_b2b, k_x3 = jax.random.split(k_w, 5)
    w1b = jax.random.normal(k_w1b, (H3, E3), dtype=jnp.float32) * (1.0 / math.sqrt(E3))
    b1b = jax.random.normal(k_b1b, (H3,), dtype=jnp.float32) * 0.1
    w2b = jax.random.normal(k_w2b, (E3, H3), dtype=jnp.float32) * (1.0 / math.sqrt(H3))
    b2b = jax.random.normal(k_b2b, (E3,), dtype=jnp.float32) * 0.1
    x3 = jax.random.normal(k_x3, (2, 16, E3), dtype=jnp.float32)
    out3 = jax.block_until_ready(
        feed_forward(x3, w1b, b1b, w2b, b2b, compute_dtype=jnp.float32,
                     force_h_tiled=True, h_tile=128))
    ref3 = reference(x3, w1b, b1b, w2b, b2b)
    assert jnp.allclose(out3, ref3, atol=2e-3, rtol=2e-3), "H-tiled path mismatch"

    print("KERNEL_OK")
</pallas_src>

<mosaic_0001>
module attributes {stable_mosaic.version = 11 : i64} {
  func.func @_ffn_kernel_resident(%arg0: i32, %arg1: memref<8x32xf32, #tpu.memory_space<vmem>>, %arg2: memref<32x128xf32, #tpu.memory_space<vmem>>, %arg3: memref<1x128xf32, #tpu.memory_space<vmem>>, %arg4: memref<128x32xf32, #tpu.memory_space<vmem>>, %arg5: memref<1x32xf32, #tpu.memory_space<vmem>>, %arg6: memref<8x32xf32, #tpu.memory_space<vmem>>) attributes {dimension_semantics = [#tpu.dimension_semantics<parallel>], iteration_bounds = array<i64: 2>, scalar_prefetch = 0 : i64, scratch_operands = 0 : i64, tpu.core_type = #tpu.core_type<tc>, window_params = [{transform_indices = @transform_0, window_bounds = array<i64: 8, 32>}, {pipeline_mode = #tpu.pipeline_mode<synchronous>, transform_indices = @transform_1, window_bounds = array<i64: 32, 128>}, {pipeline_mode = #tpu.pipeline_mode<synchronous>, transform_indices = @transform_2, window_bounds = array<i64: 1, 128>}, {pipeline_mode = #tpu.pipeline_mode<synchronous>, transform_indices = @transform_3, window_bounds = array<i64: 128, 32>}, {pipeline_mode = #tpu.pipeline_mode<synchronous>, transform_indices = @transform_4, window_bounds = array<i64: 1, 32>}, {transform_indices = @transform_5, window_bounds = array<i64: 8, 32>}]} {
    %c0 = arith.constant 0 : index
    %c0_0 = arith.constant 0 : index
    %0 = vector.load %arg1[%c0, %c0_0] : memref<8x32xf32, #tpu.memory_space<vmem>>, vector<8x32xf32>
    %c0_1 = arith.constant 0 : index
    %c0_2 = arith.constant 0 : index
    %1 = vector.load %arg2[%c0_1, %c0_2] : memref<32x128xf32, #tpu.memory_space<vmem>>, vector<32x128xf32>
    %cst = arith.constant dense<0.000000e+00> : vector<8x128xf32>
    %2 = tpu.matmul %0, %1, %cst {dimension_numbers = #tpu.dot_dimension_numbers<[1], [0], [0], [1], [0, 0, 1, 1], [], []>} : vector<8x32xf32>, vector<32x128xf32>, vector<8x128xf32> -> vector<8x128xf32>
    %c0_3 = arith.constant 0 : index
    %c0_4 = arith.constant 0 : index
    %3 = vector.load %arg3[%c0_3, %c0_4] : memref<1x128xf32, #tpu.memory_space<vmem>>, vector<1x128xf32>
    %4 = vector.broadcast %3 : vector<1x128xf32> to vector<8x128xf32>
    %5 = arith.addf %2, %4 : vector<8x128xf32>
    %cst_5 = arith.constant 5.000000e-01 : f32
    %6 = vector.broadcast %cst_5 : f32 to vector<8x128xf32>
    %7 = arith.mulf %6, %5 : vector<8x128xf32>
    %cst_6 = arith.constant 0.707106769 : f32
    %8 = vector.broadcast %cst_6 : f32 to vector<8x128xf32>
    %9 = arith.mulf %5, %8 : vector<8x128xf32>
    %10 = math.absf %9 : vector<8x128xf32>
    %cst_7 = arith.constant 0.327591091 : f32
    %11 = vector.broadcast %cst_7 : f32 to vector<8x128xf32>
    %12 = arith.mulf %11, %10 : vector<8x128xf32>
    %cst_8 = arith.constant 1.000000e+00 : f32
    %13 = vector.broadcast %cst_8 : f32 to vector<8x128xf32>
    %14 = arith.addf %13, %12 : vector<8x128xf32>
    %cst_9 = arith.constant 1.000000e+00 : f32
    %15 = vector.broadcast %cst_9 : f32 to vector<8x128xf32>
    %16 = arith.divf %15, %14 : vector<8x128xf32>
    %cst_10 = arith.constant 1.06140542 : f32
    %17 = vector.broadcast %cst_10 : f32 to vector<8x128xf32>
    %18 = arith.mulf %17, %16 : vector<8x128xf32>
    %cst_11 = arith.constant -1.45315206 : f32
    %19 = vector.broadcast %cst_11 : f32 to vector<8x128xf32>
    %20 = arith.addf %18, %19 : vector<8x128xf32>
    %21 = arith.mulf %20, %16 : vector<8x128xf32>
    %cst_12 = arith.constant 1.42141378 : f32
    %22 = vector.broadcast %cst_12 : f32 to vector<8x128xf32>
    %23 = arith.addf %21, %22 : vector<8x128xf32>
    %24 = arith.mulf %23, %16 : vector<8x128xf32>
    %cst_13 = arith.constant -0.284496725 : f32
    %25 = vector.broadcast %cst_13 : f32 to vector<8x128xf32>
    %26 = arith.addf %24, %25 : vector<8x128xf32>
    %27 = arith.mulf %26, %16 : vector<8x128xf32>
    %cst_14 = arith.constant 0.254829586 : f32
    %28 = vector.broadcast %cst_14 : f32 to vector<8x128xf32>
    %29 = arith.addf %27, %28 : vector<8x128xf32>
    %30 = arith.mulf %29, %16 : vector<8x128xf32>
    %cst_15 = arith.constant 0.000000e+00 : f32
    %31 = vector.broadcast %cst_15 : f32 to vector<8x128xf32>
    %32 = arith.subf %31, %10 : vector<8x128xf32>
    %33 = arith.mulf %32, %10 : vector<8x128xf32>
    %34 = math.exp %33 : vector<8x128xf32>
    %35 = arith.mulf %30, %34 : vector<8x128xf32>
    %cst_16 = arith.constant 1.000000e+00 : f32
    %36 = vector.broadcast %cst_16 : f32 to vector<8x128xf32>
    %37 = arith.subf %36, %35 : vector<8x128xf32>
    %cst_17 = arith.constant 0.000000e+00 : f32
    %38 = vector.broadcast %cst_17 : f32 to vector<8x128xf32>
    %39 = arith.cmpf oge, %9, %38 : vector<8x128xf32>
    %cst_18 = arith.constant 0.000000e+00 : f32
    %40 = vector.broadcast %cst_18 : f32 to vector<8x128xf32>
    %41 = arith.subf %40, %37 : vector<8x128xf32>
    %42 = arith.select %39, %37, %41 : vector<8x128xi1>, vector<8x128xf32>
    %cst_19 = arith.constant 1.000000e+00 : f32
    %43 = vector.broadcast %cst_19 : f32 to vector<8x128xf32>
    %44 = arith.addf %43, %42 : vector<8x128xf32>
    %45 = arith.mulf %7, %44 : vector<8x128xf32>
    %c0_20 = arith.constant 0 : index
    %c0_21 = arith.constant 0 : index
    %46 = vector.load %arg4[%c0_20, %c0_21] : memref<128x32xf32, #tpu.memory_space<vmem>>, vector<128x32xf32>
    %cst_22 = arith.constant dense<0.000000e+00> : vector<8x32xf32>
    %47 = tpu.matmul %45, %46, %cst_22 {dimension_numbers = #tpu.dot_dimension_numbers<[1], [0], [0], [1], [0, 0, 1, 1], [], []>} : vector<8x128xf32>, vector<128x32xf32>, vector<8x32xf32> -> vector<8x32xf32>
    %c0_23 = arith.constant 0 : index
    %c0_24 = arith.constant 0 : index
    %48 = vector.load %arg5[%c0_23, %c0_24] : memref<1x32xf32, #tpu.memory_space<vmem>>, vector<1x32xf32>
    %49 = vector.broadcast %48 : vector<1x32xf32> to vector<8x32xf32>
    %50 = arith.addf %47, %49 : vector<8x32xf32>
    %c0_25 = arith.constant 0 : index
    %c0_26 = arith.constant 0 : index
    %51 = vector.load %arg6[%c0_25, %c0_26] : memref<8x32xf32, #tpu.memory_space<vmem>>, vector<8x32xf32>
    tpu.vector_store %arg6[%c0_25, %c0_26], %50 {strides = array<i32>} : memref<8x32xf32, #tpu.memory_space<vmem>>, vector<8x32xf32>,
    return
  }
  func.func @transform_0(%arg0: i32) -> (i32, i32) {
    %c0_i32 = arith.constant 0 : i32
    %c0_i32_0 = arith.constant 0 : i32
    return %arg0, %c0_i32 : i32, i32
  }
  func.func @transform_1(%arg0: i32) -> (i32, i32) {
    %c0_i32 = arith.constant 0 : i32
    %c0_i32_0 = arith.constant 0 : i32
    %c0_i32_1 = arith.constant 0 : i32
    return %c0_i32, %c0_i32_0 : i32, i32
  }
  func.func @transform_2(%arg0: i32) -> (i32, i32) {
    %c0_i32 = arith.constant 0 : i32
    %c0_i32_0 = arith.constant 0 : i32
    %c0_i32_1 = arith.constant 0 : i32
    return %c0_i32, %c0_i32_0 : i32, i32
  }
  func.func @transform_3(%arg0: i32) -> (i32, i32) {
    %c0_i32 = arith.constant 0 : i32
    %c0_i32_0 = arith.constant 0 : i32
    %c0_i32_1 = arith.constant 0 : i32
    return %c0_i32, %c0_i32_0 : i32, i32
  }
  func.func @transform_4(%arg0: i32) -> (i32, i32) {
    %c0_i32 = arith.constant 0 : i32
    %c0_i32_0 = arith.constant 0 : i32
    %c0_i32_1 = arith.constant 0 : i32
    return %c0_i32, %c0_i32_0 : i32, i32
  }
  func.func @transform_5(%arg0: i32) -> (i32, i32) {
    %c0_i32 = arith.constant 0 : i32
    %c0_i32_0 = arith.constant 0 : i32
    return %arg0, %c0_i32 : i32, i32
  }
}

</mosaic_0001>

<llo_original>
// kernel: tpu_custom_call.1
$region0: #{tpu_custom_call.1}
  #allocation0 [shape = 'u32[]', space=smem, size = 0x4, offset = 0x4, fixed_abs, tag = 'smem constant byte address 0x4 - core index']
  #allocation1 [shape = 'u32[72,128]{1,0:T(1,128)}', space=vmem, size = 0x9000, scoped, tag = 'internal scratch']
  %s0 = inlined_call_operand.vmem [shape: f32[16,32], index: 0, kind: input, shape index: {}]
  %s1 = inlined_call_operand.vmem [shape: f32[32,128], index: 1, kind: input, shape index: {}]
  %s2 = inlined_call_operand.vmem [shape: f32[1,128], index: 2, kind: input, shape index: {}]
  %s3 = inlined_call_operand.vmem [shape: f32[128,32], index: 3, kind: input, shape index: {}]
  %s4 = inlined_call_operand.vmem [shape: f32[1,32], index: 4, kind: input, shape index: {}]
  %s5 = inlined_call_operand.hbm [shape: f32[16,32], index: 5, kind: output, shape index: {}]
  %s6 = sld [smem:[#allocation0]]
  $region53: #{tpu_custom_call.1} parent=0
    _
  %s8 = ssub.s32 1, %s6
  %s9 = scalar_select 0, %s8, %s6
  $region1: #{tpu_custom_call.1} parent=0
    #allocation2 [shape = 'u8[8192]{0}', space=vmem, size = 0x2000, scoped, tag = 'output window, operand 0']
    #allocation3 [shape = 's32[2]{0}', space=sflag, size = 0x8, scoped, tag = 'scoped memory for tpu_custom_call.1']
    %10 = vsyncpa [#allocation3], 0
    %s11 = scalar_lea.sflag [#allocation3], 1
    %12 = vsyncpa %s11, 0
    loop: start=0, step=1, limit=4
    $region2: #{tpu_custom_call.1} parent=1 // loop_pre_header
      _
    $region3: #{tpu_custom_call.1} parent=1 // loop_header
      %s14 = sphi 0, %s18
      %p15 = scmp.ge.s32.totalorder %s14, 4
      %s24 = sphi 0, %s26
      %s27 = sphi 0, %s24
      %s28 = sphi 0, %s27
      %s44 = sphi 0, %s28
      %s48 = sphi 0, %s48
      %s50 = sphi 0, %s48
      %s51 = sphi 0, %s50
      %s65 = sphi 0, %s51
      %s69 = sphi 0, %s69
      %s71 = sphi 0, %s69
      %s72 = sphi 0, %s71
      %s86 = sphi 0, %s72
      %s90 = sphi 0, %s90
      %s92 = sphi 0, %s90
      %s93 = sphi 0, %s92
      %s107 = sphi 0, %s93
      %s111 = sphi 0, %s111
      %s113 = sphi 0, %s111
      %s114 = sphi 0, %s113
      %s128 = sphi 0, %s114
      %s134 = sphi 0, %s136
      %s137 = sphi 0, %s134
      %s138 = sphi 0, %s137
      %s154 = sphi 0, %s138
    $region4: #{tpu_custom_call.1} parent=1 // loop_header_branch
      %17 = sbr.rel (%p15) target = $region8
    $region5: #{tpu_custom_call.1} parent=1 // loop_body
      %s19 = ssub.s32 %s14, 1
      %s20 = ssub.s32 %s14, 2
      %s21 = sadd.s32 %s14, 1
      %s22 = ssub.s32 %s14, %s21
      %p23 = scmp.eq.s32.totalorder %s22, 0
      %s25 = sadd.s32 %s24, 1
      %s26 = scalar_select %p23, %s24, %s25
      %p29 = pneg %p23
      %p30 = scmp.eq.s32.totalorder %s14, 1
      %p31 = por %p29, %p30
      %p32 = scmp.ne.s32.totalorder %s24, %s27
      %p33 = scmp.eq.s32.totalorder %s14, 0
      %p34 = por %p32, %p33
      %p35 = scmp.ne.s32.totalorder %s24, %s27
      %p36 = scmp.eq.s32.totalorder %s19, 1
      %p37 = por %p35, %p36
      %p38 = scmp.ne.s32.totalorder %s27, %s28
      %p39 = scmp.eq.s32.totalorder %s19, 0
      %p40 = por %p38, %p39
      %p41 = scmp.ne.s32.totalorder %s27, %s28
      %p42 = scmp.eq.s32.totalorder %s20, 1
      %p43 = por %p41, %p42
      %p45 = scmp.ne.s32.totalorder %s28, %s44
      %p46 = scmp.eq.s32.totalorder %s20, 0
      %p47 = por %p45, %p46
      %s49 = sadd.s32 %s48, 1
      %p52 = scmp.eq.s32.totalorder %s14, 1
      %p53 = scmp.ne.s32.totalorder %s48, %s50
      %p54 = scmp.eq.s32.totalorder %s14, 0
      %p55 = por %p53, %p54
      %p56 = scmp.ne.s32.totalorder %s48, %s50
      %p57 = scmp.eq.s32.totalorder %s19, 1
      %p58 = por %p56, %p57
      %p59 = scmp.ne.s32.totalorder %s50, %s51
      %p60 = scmp.eq.s32.totalorder %s19, 0
      %p61 = por %p59, %p60
      %p62 = scmp.ne.s32.totalorder %s50, %s51
      %p63 = scmp.eq.s32.totalorder %s20, 1
      %p64 = por %p62, %p63
      %p66 = scmp.ne.s32.totalorder %s51, %s65
      %p67 = scmp.eq.s32.totalorder %s20, 0
      %p68 = por %p66, %p67
      %s70 = sadd.s32 %s69, 1
      %p73 = scmp.eq.s32.totalorder %s14, 1
      %p74 = scmp.ne.s32.totalorder %s69, %s71
      %p75 = scmp.eq.s32.totalorder %s14, 0
      %p76 = por %p74, %p75
      %p77 = scmp.ne.s32.totalorder %s69, %s71
      %p78 = scmp.eq.s32.totalorder %s19, 1
      %p79 = por %p77, %p78
      %p80 = scmp.ne.s32.totalorder %s71, %s72
      %p81 = scmp.eq.s32.totalorder %s19, 0
      %p82 = por %p80, %p81
      %p83 = scmp.ne.s32.totalorder %s71, %s72
      %p84 = scmp.eq.s32.totalorder %s20, 1
      %p85 = por %p83, %p84
      %p87 = scmp.ne.s32.totalorder %s72, %s86
      %p88 = scmp.eq.s32.totalorder %s20, 0
      %p89 = por %p87, %p88
      %s91 = sadd.s32 %s90, 1
      %p94 = scmp.eq.s32.totalorder %s14, 1
      %p95 = scmp.ne.s32.totalorder %s90, %s92
      %p96 = scmp.eq.s32.totalorder %s14, 0
      %p97 = por %p95, %p96
      %p98 = scmp.ne.s32.totalorder %s90, %s92
      %p99 = scmp.eq.s32.totalorder %s19, 1
      %p100 = por %p98, %p99
      %p101 = scmp.ne.s32.totalorder %s92, %s93
      %p102 = scmp.eq.s32.totalorder %s19, 0
      %p103 = por %p101, %p102
      %p104 = scmp.ne.s32.totalorder %s92, %s93
      %p105 = scmp.eq.s32.totalorder %s20, 1
      %p106 = por %p104, %p105
      %p108 = scmp.ne.s32.totalorder %s93, %s107
      %p109 = scmp.eq.s32.totalorder %s20, 0
      %p110 = por %p108, %p109
      %s112 = sadd.s32 %s111, 1
      %p115 = scmp.eq.s32.totalorder %s14, 1
      %p116 = scmp.ne.s32.totalorder %s111, %s113
      %p117 = scmp.eq.s32.totalorder %s14, 0
      %p118 = por %p116, %p117
      %p119 = scmp.ne.s32.totalorder %s111, %s113
      %p120 = scmp.eq.s32.totalorder %s19, 1
      %p121 = por %p119, %p120
      %p122 = scmp.ne.s32.totalorder %s113, %s114
      %p123 = scmp.eq.s32.totalorder %s19, 0
      %p124 = por %p122, %p123
      %p125 = scmp.ne.s32.totalorder %s113, %s114
      %p126 = scmp.eq.s32.totalorder %s20, 1
      %p127 = por %p125, %p126
      %p129 = scmp.ne.s32.totalorder %s114, %s128
      %p130 = scmp.eq.s32.totalorder %s20, 0
      %p131 = por %p129, %p130
      %s132 = ssub.s32 %s14, %s21
      %p133 = scmp.eq.s32.totalorder %s132, 0
      %s135 = sadd.s32 %s134, 1
      %s136 = scalar_select %p133, %s134, %s135
      %p139 = pneg %p133
      %p140 = scmp.eq.s32.totalorder %s14, 1
      %p141 = por %p139, %p140
      %p142 = scmp.ne.s32.totalorder %s134, %s137
      %p143 = scmp.eq.s32.totalorder %s14, 0
      %p144 = por %p142, %p143
      %p145 = scmp.ne.s32.totalorder %s134, %s137
      %p146 = scmp.eq.s32.totalorder %s19, 1
      %p147 = por %p145, %p146
      %p148 = scmp.ne.s32.totalorder %s137, %s138
      %p149 = scmp.eq.s32.totalorder %s19, 0
      %p150 = por %p148, %p149
      %p151 = scmp.ne.s32.totalorder %s137, %s138
      %p152 = scmp.eq.s32.totalorder %s20, 1
      %p153 = por %p151, %p152
      %p155 = scmp.ne.s32.totalorder %s138, %s154
      %p156 = scmp.eq.s32.totalorder %s20, 0
      %p157 = por %p155, %p156
      %p158 = scmp.le.s32.totalorder 1, %s14
      %p159 = scmp.lt.s32.totalorder %s14, 3
      %p160 = pnand %p158, %p159
      %p161 = pneg %p160
      // Predicated region
      $region9: #{tpu_custom_call.1} parent=5 // pred_check
        _
      $region10: #{tpu_custom_call.1} parent=5 // pred_check_branch
        %163 = sbr.rel (%p160) target = $region12
      $region11: #{tpu_custom_call.1} parent=5 // pred_region
        %s164 = ssub.s32 %s14, 1
        // Predicated region
        $region13: #{tpu_custom_call.1} parent=11 // pred_check
          %p165 = pneg %p61
        $region14: #{tpu_custom_call.1} parent=11 // pred_check_branch
          %167 = sbr.rel (%p165) target = $region16
        $region15: #{tpu_custom_call.1} parent=11 // pred_region
          _
        $region16: #{tpu_custom_call.1} parent=11 // pred_fallthru
          _
        // Predicated region
        $region17: #{tpu_custom_call.1} parent=11 // pred_check
          %p168 = pneg %p82
        $region18: #{tpu_custom_call.1} parent=11 // pred_check_branch
          %170 = sbr.rel (%p168) target = $region20
        $region19: #{tpu_custom_call.1} parent=11 // pred_region
          _
        $region20: #{tpu_custom_call.1} parent=11 // pred_fallthru
          _
        // Predicated region
        $region21: #{tpu_custom_call.1} parent=11 // pred_check
          %p171 = pneg %p103
        $region22: #{tpu_custom_call.1} parent=11 // pred_check_branch
          %173 = sbr.rel (%p171) target = $region24
        $region23: #{tpu_custom_call.1} parent=11 // pred_region
          _
        $region24: #{tpu_custom_call.1} parent=11 // pred_fallthru
          _
        // Predicated region
        $region25: #{tpu_custom_call.1} parent=11 // pred_check
          %p174 = pneg %p124
        $region26: #{tpu_custom_call.1} parent=11 // pred_check_branch
          %176 = sbr.rel (%p174) target = $region28
        $region27: #{tpu_custom_call.1} parent=11 // pred_region
          _
        $region28: #{tpu_custom_call.1} parent=11 // pred_fallthru
          _
      $region12: #{tpu_custom_call.1} parent=5 // pred_fallthru
        _
      %p177 = scmp.lt.s32.totalorder %s14, 2
      // Predicated region
      $region29: #{tpu_custom_call.1} parent=5 // pred_check
        %p178 = pneg %p177
      $region30: #{tpu_custom_call.1} parent=5 // pred_check_branch
        %180 = sbr.rel (%p178) target = $region32
      $region31: #{tpu_custom_call.1} parent=5 // pred_region
        // Predicated region
        $region33: #{tpu_custom_call.1} parent=31 // pred_check
          %p181 = pneg %p34
        $region34: #{tpu_custom_call.1} parent=31 // pred_check_branch
          %183 = sbr.rel (%p181) target = $region36
        $region35: #{tpu_custom_call.1} parent=31 // pred_region
          %p184 = scmp.lt.s32.totalorder %s14, 1
          %s185 = scalar_select %p184, %s14, 1
          %s186 = smul.addr %s185, 8
          %s187 = scalar_lea.vmem %s0, %s186
        $region36: #{tpu_custom_call.1} parent=31 // pred_fallthru
          _
      $region32: #{tpu_custom_call.1} parent=5 // pred_fallthru
        _
      %p188 = scmp.le.s32.totalorder 1, %s14
      %p189 = scmp.lt.s32.totalorder %s14, 3
      %p190 = pnand %p188, %p189
      %p191 = pneg %p190
      // Predicated region
      $region37: #{tpu_custom_call.1} parent=5 // pred_check
        _
      $region38: #{tpu_custom_call.1} parent=5 // pred_check_branch
        %193 = sbr.rel (%p190) target = $region40
      $region39: #{tpu_custom_call.1} parent=5 // pred_region
        %s194 = ssub.s32 %s14, 1
        %p195 = scmp.lt.s32.totalorder %s19, 1
        %s196 = scalar_select %p195, %s19, 1
        %s197 = smul.addr %s196, 8
        %s198 = scalar_lea.vmem %s0, %s197
        %p199 = pneg %p40
        %p200 = pneg %p37
        %p201 = pneg %p61
        %p202 = pneg %p58
        %p203 = pneg %p82
        %p204 = pneg %p79
        %p205 = pneg %p103
        %p206 = pneg %p100
        %p207 = pneg %p124
        %p208 = pneg %p121
        %p209 = pneg %p150
        %p210 = pneg %p147
        %s211 = sand.u32 %s137, 1
        %s212 = scalar_lea.sflag [#allocation3], %s211
        %s213 = sand.u32 %s137, 1
        %s214 = smul.addr %s213, 8
        %s215 = scalar_lea.vmem [#allocation2], %s214
        %p216 = scmp.lt.s32.totalorder %s19, 1
        %s217 = scalar_select %p216, %s19, 1
        %s218 = smul.addr %s217, 8
        %s219 = scalar_lea.vmem %s0, %s218
        %v220 = vld [vmem:[%s219] sm:$0xff]
        %v221 = vld [vmem:[%s1] sm:$0xff]
        %v222 = vld [vmem:[%s1 + $0x8] sm:$0xff]
        %v223 = vld [vmem:[%s1 + $0x10] sm:$0xff]
        %v224 = vld [vmem:[%s1 + $0x18] sm:$0xff]
        %v225 = vld [vmem:[%s2] sm:$0x1]
        %v227 = vperm.slane %v225, 0
        %vm229 = vcmask 261120
        %v231 = vsel %vm229, %v220, 0
        %233 = vmatpush.msra.mxu0 0.0
        %234 = vmatpush.msra.mxu0 0.0
        %235 = vmatpush.msra.mxu0 0.0
        %236 = vmatpush.msra.mxu0 0.0
        %237 = vmatpush.msra.mxu0 0.0
        %238 = vmatpush.msra.mxu0 0.0
        %239 = vmatpush.msra.mxu0 0.0
        %240 = vmatpush.msra.mxu0 0.0
        %241 = vmatpush.msra.mxu0 0.0
        %242 = vmatpush.msra.mxu0 0.0
        %243 = vmatpush.msra.mxu0 0.0
        %244 = vmatpush.msra.mxu0 0.0
        %245 = vmatpush.msra.mxu0 %v224
        %246 = vmatpush.msra.mxu0 %v223
        %247 = vmatpush.msra.mxu0 %v222
        %248 = vmatpush.msra.mxu0 %v221
        %249 = vmatmul.f32.gmra.mxu0 %v231
        %v250 = vpop.f32.mrf.mxu0
        %v251 = vadd.f32 %v227, %v250
        %252 = vdwg.mxu0
        %v253 = vmul.f32 %v251, 0.5
        %v254 = vmul.f32 %v251, 0.70710677
        %v255 = vand.u32 2147483647, %v254
        %v256 = vmul.f32 %v255, 0.3275911
        %v257 = vadd.f32 %v256, 1.0
        %v258 = vrcp.pop %v257
        %v259 = vmul.f32 %v257, %v258
        %v260 = vsub.f32 1.0, %v259
        %v261 = vmul.f32 %v258, %v260
        %v262 = vadd.f32 %v258, %v261
        %vm263 = vweird.f32 %v257
        %vm264 = vweird.f32 %v258
        %vm265 = vmor %vm263, %vm264
        %v266 = vsel %vm265, %v258, %v262
        %v267 = vand.u32 2147483647, %v257
        %vm268 = vcmp.eq.f32.partialorder %v267, 8.507059e+37
        %v269 = vand.u32 %v257, 2147483648
        %v270 = vor.u32 1.1754944e-38, %v269
        %v271 = vsel %vm268, %v270, %v266
        %v272 = vmul.f32 1.0, %v271
        %v273 = vmul.f32 %v272, 1.0614054
        %v274 = vadd.f32 %v273, -1.4531521
        %v275 = vmul.f32 %v274, %v272
        %v276 = vadd.f32 %v275, 1.4214138
        %v277 = vmul.f32 %v276, %v272
        %v278 = vadd.f32 %v277, -0.28449672
        %v279 = vmul.f32 %v278, %v272
        %v280 = vadd.f32 %v279, 0.2548296
        %v281 = vmul.f32 %v280, %v272
        %v282 = vsub.f32 0.0, %v255
        %v283 = vmul.f32 %v282, %v255
        %v284 = vmul.f32 %v283, 1.442695
        %v285 = vpow.pop %v284
        %v286 = vmul.f32 %v281, %v285
        %v287 = vsub.f32 1.0, %v286
        %vm288 = vcmp.ge.f32.partialorder %v254, 0.0
        %v289 = vsub.f32 0.0, %v287
        %v290 = vsel %vm288, %v287, %v289
        %v291 = vadd.f32 %v290, 1.0
        %v292 = vmul.f32 %v253, %v291
        %v293 = vld [vmem:[%s3] sm:$0xff]
        %v294 = vld [vmem:[%s3 + $0x8] sm:$0xff]
        %v295 = vld [vmem:[%s3 + $0x10] sm:$0xff]
        %v296 = vld [vmem:[%s3 + $0x18] sm:$0xff]
        %v297 = vld [vmem:[%s3 + $0x20] sm:$0xff]
        %v298 = vld [vmem:[%s3 + $0x28] sm:$0xff]
        %v299 = vld [vmem:[%s3 + $0x30] sm:$0xff]
        %v300 = vld [vmem:[%s3 + $0x38] sm:$0xff]
        %v301 = vld [vmem:[%s3 + $0x40] sm:$0xff]
        %v302 = vld [vmem:[%s3 + $0x48] sm:$0xff]
        %v303 = vld [vmem:[%s3 + $0x50] sm:$0xff]
        %v304 = vld [vmem:[%s3 + $0x58] sm:$0xff]
        %v305 = vld [vmem:[%s3 + $0x60] sm:$0xff]
        %v306 = vld [vmem:[%s3 + $0x68] sm:$0xff]
        %v307 = vld [vmem:[%s3 + $0x70] sm:$0xff]
        %v308 = vld [vmem:[%s3 + $0x78] sm:$0xff]
        %v309 = vld [vmem:[%s4] sm:$0x1]
        %v311 = vperm.slane %v309, 0
        %313 = vmatpush.msra.mxu0 %v308
        %314 = vmatpush.msra.mxu0 %v307
        %315 = vmatpush.msra.mxu0 %v306
        %316 = vmatpush.msra.mxu0 %v305
        %317 = vmatpush.msra.mxu0 %v304
        %318 = vmatpush.msra.mxu0 %v303
        %319 = vmatpush.msra.mxu0 %v302
        %320 = vmatpush.msra.mxu0 %v301
        %321 = vmatpush.msra.mxu0 %v300
        %322 = vmatpush.msra.mxu0 %v299
        %323 = vmatpush.msra.mxu0 %v298
        %324 = vmatpush.msra.mxu0 %v297
        %325 = vmatpush.msra.mxu0 %v296
        %326 = vmatpush.msra.mxu0 %v295
        %327 = vmatpush.msra.mxu0 %v294
        %328 = vmatpush.msra.mxu0 %v293
        %329 = vmatmul.f32.gmra.mxu0 %v292
        %v330 = vpop.f32.mrf.mxu0
        %v331 = vadd.f32 %v311, %v330
        %332 = vdwg.mxu0
        %333 = vst.msk [vmem:[%s215] sm:$0xff] %vm229, %v331
        %s334 = sand.u32 %s137, 1
        %s335 = scalar_lea.sflag [#allocation3], %s334
        %s336 = sand.u32 %s137, 1
        %s337 = smul.addr %s336, 8
        %s338 = scalar_lea.vmem [#allocation2], %s337
        // Predicated region
        $region41: #{tpu_custom_call.1} parent=39 // pred_check
          %p339 = pneg %p147
        $region42: #{tpu_custom_call.1} parent=39 // pred_check_branch
          %341 = sbr.rel (%p339) target = $region44
        $region43: #{tpu_custom_call.1} parent=39 // pred_region
          %343 = vsyncadd %s335, 0
          %s344 = smul.addr %s19, 8
          %s345 = scalar_lea.hbm %s5, %s344
          %s347 = sshll.u32 %s338, 4
          %s348 = int_to_ptr.vmem [resolvable:$true] %s347
          %s349 = sshll.u32 %s345, 4
          %s350 = int_to_ptr.hbm [resolvable:$true] %s349
          %352 = dma.vmem_to_hbm [thread:$0]  %s348, 128, %s350, %s335
        $region44: #{tpu_custom_call.1} parent=39 // pred_fallthru
          _
      $region40: #{tpu_custom_call.1} parent=5 // pred_fallthru
        _
      %p353 = scmp.le.s32.totalorder 2, %s14
      // Predicated region
      $region45: #{tpu_custom_call.1} parent=5 // pred_check
        %p354 = pneg %p353
      $region46: #{tpu_custom_call.1} parent=5 // pred_check_branch
        %356 = sbr.rel (%p354) target = $region48
      $region47: #{tpu_custom_call.1} parent=5 // pred_region
        %s357 = ssub.s32 %s14, 2
        // Predicated region
        $region49: #{tpu_custom_call.1} parent=47 // pred_check
          %p358 = pneg %p153
        $region50: #{tpu_custom_call.1} parent=47 // pred_check_branch
          %360 = sbr.rel (%p358) target = $region52
        $region51: #{tpu_custom_call.1} parent=47 // pred_region
          %s361 = sand.u32 %s138, 1
          %s362 = scalar_lea.sflag [#allocation3], %s361
          %s363 = sand.u32 %s138, 1
          %s364 = smul.addr %s363, 8
          %s365 = scalar_lea.vmem [#allocation2], %s364
          %367 = dma.done %s362, 128
        $region52: #{tpu_custom_call.1} parent=47 // pred_fallthru
          _
      $region48: #{tpu_custom_call.1} parent=5 // pred_fallthru
        _
    $region6: #{tpu_custom_call.1} parent=1 // loop_footer
      %s18 = sadd.s32 1, %s14
    $region7: #{tpu_custom_call.1} parent=1 // loop_footer_branch
      %13 = sbr.rel target = $region3
    $region8: #{tpu_custom_call.1} parent=1 // loop_exit
      _
    %368 = vsyncpa [#allocation3], 1
    %s369 = scalar_lea.sflag [#allocation3], 1
    %370 = vsyncpa %s369, 1

</llo_original>
